<compile_context>
chip_gen: v7x
topology: tpu7x:2x2x1
jax: 0.10.0
libtpu: 0.0.40
codegen_flags: <defaults>
</compile_context>

<pallas_src>
import functools

import jax
import jax.numpy as jnp
from jax.experimental import pallas as pl
from jax.experimental.pallas import tpu as pltpu

LANE = 128


def _round_up(a, b):
    return -(-a // b) * b


@functools.lru_cache(maxsize=1)
def _chip_params():
    """Returns (block_bytes, vmem_limit_bytes_or_None, is_v7x)."""
    kind = ""
    try:
        kind = jax.devices()[0].device_kind.lower()
    except Exception:
        pass
    if "v7" in kind:
        # ~8 MiB blocks; in+out x double-buffer = 32 MiB exceeds the 32 MiB
        # scoped default, so raise the scoped limit (64 MiB physical on v7x).
        return 8 << 20, 48 << 20, True
    if "v6" in kind:
        # ~4 MiB blocks; 16 MiB of buffers fits the 32 MiB scoped default.
        return 4 << 20, None, False
    # v5e (and unknown chips): 2 MiB blocks; 8 MiB fits the 16 MiB default.
    return 2 << 20, None, False


def _swish_kernel(x_ref, o_ref, *, use_approx_recip):
    v = x_ref[...].astype(jnp.float32)
    if use_approx_recip:
        # exp and the reciprocal both land on the EUP slot (v7x insurance);
        # differs from jax.nn.sigmoid by a few ulps.
        s = pl.reciprocal(1.0 + jnp.exp(-v), approx=True)
    else:
        s = jax.nn.sigmoid(v)
    o_ref[...] = (v * s).astype(o_ref.dtype)


def swish_pallas(x):
    """Elementwise SiLU: x * sigmoid(x); same shape & dtype as the input."""
    orig_shape = x.shape
    dtype = x.dtype
    n = x.size
    if n == 0:
        return x

    block_bytes, vmem_limit, is_v7x = _chip_params()
    itemsize = dtype.itemsize
    # Packed-dtype sublane minimum: 8 for 4-byte, 16 for 2-byte, 32 for 1-byte.
    sub = max(8, 32 // max(1, itemsize))

    flat = x.reshape(-1)

    # Lane-dense column count that divides n exactly -> no pad, no slice.
    cols = None
    for c in (4096, 2048, 1024, 512, 256, 128):
        if n % c == 0:
            cols = c
            break
    if cols is None:
        # Rare ragged fallback (n not a multiple of 128): minimal pad + slice.
        # TODO(synk): could instead prefetch n and mask the last block's store.
        padded_n = _round_up(n, LANE)
        flat = jnp.pad(flat, (0, padded_n - n))
        cols = LANE
    else:
        padded_n = n

    rows = padded_n // cols
    x2 = flat.reshape(rows, cols)

    # Row blocking: byte-sized blocks; at least ~4 grid steps once the tensor
    # is big enough (> ~1 MiB) that overlapping the in/out DMAs matters.
    max_rows_per_block = max(sub, ((block_bytes // itemsize) // cols) // sub * sub)
    total_bytes = rows * cols * itemsize
    if rows <= sub or (total_bytes <= (1 << 20) and rows <= max_rows_per_block):
        # Small tensor: one full-extent block (a full-extent dim is exempt
        # from the (sub, 128) divisibility rule).
        block_rows = rows
    else:
        quarter = _round_up(pl.cdiv(rows, 4), sub)
        block_rows = max(sub, min(max_rows_per_block, quarter))
    grid = (pl.cdiv(rows, block_rows),)

    # v7x: split the grid across both TensorCores when there is enough work.
    if is_v7x and grid[0] >= 2:
        dim_sem = (pltpu.CORE_PARALLEL,)
    else:
        dim_sem = ("parallel",)

    kernel = functools.partial(_swish_kernel, use_approx_recip=is_v7x)

    out2 = pl.pallas_call(
        kernel,
        out_shape=jax.ShapeDtypeStruct((rows, cols), dtype),
        grid_spec=pltpu.PrefetchScalarGridSpec(
            num_scalar_prefetch=0,
            grid=grid,
            in_specs=[pl.BlockSpec((block_rows, cols), lambda i: (i, 0))],
            out_specs=pl.BlockSpec((block_rows, cols), lambda i: (i, 0)),
        ),
        compiler_params=pltpu.CompilerParams(
            dimension_semantics=dim_sem,
            vmem_limit_bytes=vmem_limit,
        ),
    )(x2)

    out_flat = out2.reshape(-1)
    if padded_n != n:
        out_flat = out_flat[:n]
    return out_flat.reshape(orig_shape)


if __name__ == "__main__":
    key = jax.random.PRNGKey(0)
    k1, k2, k3 = jax.random.split(key, 3)

    _, _, _is_v7x = _chip_params()
    # Exact-sigmoid path matches jax.nn.sigmoid to f32 roundoff; the v7x
    # EUP approx-reciprocal path can differ by a few ulps, so loosen there.
    tol = 2e-3 if _is_v7x else 1e-5

    # Main check: small 4-D activation tensor (batch=2, channels=4, 16x16).
    x = jax.random.normal(k1, (2, 4, 16, 16), jnp.float32)
    out = jax.block_until_ready(swish_pallas(x))
    ref = x * jax.nn.sigmoid(x)
    assert out.shape == x.shape and out.dtype == x.dtype
    err = float(jnp.max(jnp.abs(out - ref)))
    assert err < tol, f"max abs error {err}"

    # Ragged size: exercises the minimal-pad fallback path.
    y = jax.random.normal(k2, (3, 5, 77), jnp.float32)
    out_y = jax.block_until_ready(swish_pallas(y))
    ref_y = y * jax.nn.sigmoid(y)
    assert out_y.shape == y.shape
    err_y = float(jnp.max(jnp.abs(out_y - ref_y)))
    assert err_y < tol, f"max abs error {err_y}"

    # Multi-block path with a partial last block (rows=150, block_rows=40).
    z = jax.random.normal(k3, (3, 100, 2048), jnp.float32)
    out_z = jax.block_until_ready(swish_pallas(z))
    ref_z = z * jax.nn.sigmoid(z)
    err_z = float(jnp.max(jnp.abs(out_z - ref_z)))
    assert err_z < tol, f"max abs error {err_z}"

    print("KERNEL_OK")
</pallas_src>

<mosaic_0001>
module attributes {stable_mosaic.version = 11 : i64} {
  func.func @_swish_kernel(%arg0: i32, %arg1: memref<1x2048xf32, #tpu.memory_space<vmem>>, %arg2: memref<1x2048xf32, #tpu.memory_space<vmem>>) attributes {dimension_semantics = [#tpu.dimension_semantics<parallel>], iteration_bounds = array<i64: 1>, scalar_prefetch = 0 : i64, scratch_operands = 0 : i64, tpu.core_type = #tpu.core_type<tc>, window_params = [{transform_indices = @transform_0, window_bounds = array<i64: 1, 2048>}, {transform_indices = @transform_1, window_bounds = array<i64: 1, 2048>}]} {
    %c0 = arith.constant 0 : index
    %c0_0 = arith.constant 0 : index
    %0 = vector.load %arg1[%c0, %c0_0] : memref<1x2048xf32, #tpu.memory_space<vmem>>, vector<1x2048xf32>
    %1 = arith.negf %0 : vector<1x2048xf32>
    %2 = math.exp %1 : vector<1x2048xf32>
    %cst = arith.constant 1.000000e+00 : f32
    %3 = vector.broadcast %cst : f32 to vector<1x2048xf32>
    %4 = arith.addf %3, %2 : vector<1x2048xf32>
    %5 = arith.divf %3, %4 : vector<1x2048xf32>
    %6 = arith.mulf %0, %5 : vector<1x2048xf32>
    %c0_1 = arith.constant 0 : index
    %c0_2 = arith.constant 0 : index
    %7 = vector.load %arg2[%c0_1, %c0_2] : memref<1x2048xf32, #tpu.memory_space<vmem>>, vector<1x2048xf32>
    tpu.vector_store %arg2[%c0_1, %c0_2], %6 {strides = array<i32>} : memref<1x2048xf32, #tpu.memory_space<vmem>>, vector<1x2048xf32>,
    return
  }
  func.func @transform_0(%arg0: i32) -> (i32, i32) {
    %c0_i32 = arith.constant 0 : i32
    %c0_i32_0 = arith.constant 0 : i32
    return %arg0, %c0_i32 : i32, i32
  }
  func.func @transform_1(%arg0: i32) -> (i32, i32) {
    %c0_i32 = arith.constant 0 : i32
    %c0_i32_0 = arith.constant 0 : i32
    return %arg0, %c0_i32 : i32, i32
  }
}

</mosaic_0001>

<llo_original>
// kernel: tpu_custom_call.1
$region0: #{tpu_custom_call.1}
  #allocation0 [shape = 'u32[]', space=smem, size = 0x4, offset = 0x4, fixed_abs, tag = 'smem constant byte address 0x4 - core index']
  #allocation1 [shape = 'u32[144,128]{1,0:T(1,128)}', space=vmem, size = 0x12000, scoped, tag = 'internal scratch']
  %s0 = inlined_call_operand.hbm [shape: f32[1,2048], index: 0, kind: input, shape index: {}]
  %s1 = inlined_call_operand.hbm [shape: f32[1,2048], index: 1, kind: output, shape index: {}]
  %s2 = sld [smem:[#allocation0]]
  $region18: #{tpu_custom_call.1} parent=0
    _
  %s4 = ssub.s32 1, %s2
  %s5 = scalar_select 0, %s4, %s2
  $region1: #{tpu_custom_call.1} parent=0
    #allocation2 [shape = 'u8[8192]{0}', space=vmem, size = 0x2000, scoped, tag = 'input window, operand 0, single buffered']
    #allocation3 [shape = 's32[1]{0}', space=sflag, size = 0x4, scoped, tag = 'scoped memory for tpu_custom_call.1']
    #allocation4 [shape = 's32[1]{0}', space=sflag, size = 0x4, scoped, tag = 'scoped memory for tpu_custom_call.1']
    #allocation5 [shape = 'u8[8192]{0}', space=vmem, size = 0x2000, scoped, tag = 'output window, operand 0, single buffered']
    %6 = vsyncpa [#allocation3], 0
    %7 = vsyncpa [#allocation4], 0
    // Predicated region
    $region2: #{tpu_custom_call.1} parent=1 // pred_check
      _
    $region3: #{tpu_custom_call.1} parent=1 // pred_check_branch
      %9 = sbr.rel (0) target = $region5
    $region4: #{tpu_custom_call.1} parent=1 // pred_region
      %s11 = ssub.s32 256, 256
      %12 = vsyncadd [#allocation3], %s11
      %s14 = sshll.u32 [#allocation2], 4
      %s15 = int_to_ptr.vmem [resolvable:$true] %s14
      %17 = dma.hbm_to_vmem [thread:$0]  %s0, 256, %s15, [#allocation3]
    $region5: #{tpu_custom_call.1} parent=1 // pred_fallthru
      _
    // Predicated region
    $region6: #{tpu_custom_call.1} parent=1 // pred_check
      _
    $region7: #{tpu_custom_call.1} parent=1 // pred_check_branch
      %19 = sbr.rel (0) target = $region9
    $region8: #{tpu_custom_call.1} parent=1 // pred_region
      %20 = dma.done [#allocation3], 256
    $region9: #{tpu_custom_call.1} parent=1 // pred_fallthru
      _
    %v21 = vld [vmem:[#allocation2] sm:$0xff]
    %v22 = vld [vmem:[#allocation2 + $0x8] sm:$0xff]
    %v23 = vxor.u32 %v21, 2147483648
    %v24 = vxor.u32 %v22, 2147483648
    %v25 = vmul.f32 %v23, 1.442695
    %v26 = vpow.pop %v25
    %v27 = vmul.f32 %v24, 1.442695
    %v28 = vpow.pop %v27
    %v29 = vadd.f32 %v26, 1.0
    %v30 = vadd.f32 %v28, 1.0
    %v31 = vrcp.pop %v29
    %v32 = vmul.f32 1.0, %v31
    %v33 = vrcp.pop %v30
    %v34 = vmul.f32 1.0, %v33
    %v35 = vmul.f32 %v21, %v32
    %v36 = vmul.f32 %v22, %v34
    %37 = vst [vmem:[#allocation5] sm:$0xff] %v35
    %38 = vst [vmem:[#allocation5 + $0x8] sm:$0xff] %v36
    // Predicated region
    $region10: #{tpu_custom_call.1} parent=1 // pred_check
      _
    $region11: #{tpu_custom_call.1} parent=1 // pred_check_branch
      %40 = sbr.rel (0) target = $region13
    $region12: #{tpu_custom_call.1} parent=1 // pred_region
      %s42 = ssub.s32 256, 256
      %43 = vsyncadd [#allocation4], %s42
      %s45 = sshll.u32 [#allocation5], 4
      %s46 = int_to_ptr.vmem [resolvable:$true] %s45
      %48 = dma.vmem_to_hbm [thread:$0]  %s46, 256, %s1, [#allocation4]
    $region13: #{tpu_custom_call.1} parent=1 // pred_fallthru
      _
    // Predicated region
    $region14: #{tpu_custom_call.1} parent=1 // pred_check
      _
    $region15: #{tpu_custom_call.1} parent=1 // pred_check_branch
      %50 = sbr.rel (0) target = $region17
    $region16: #{tpu_custom_call.1} parent=1 // pred_region
      %51 = dma.done [#allocation4], 256
    $region17: #{tpu_custom_call.1} parent=1 // pred_fallthru
      _
    %52 = vsyncpa [#allocation3], 1
    %53 = vsyncpa [#allocation4], 1

</llo_original>
